<compile_context>
chip_gen: v5e
topology: v5e:2x2
jax: 0.10.0
libtpu: 0.0.40
codegen_flags: <defaults>
</compile_context>

<pallas_src>
import jax
import jax.numpy as jnp
from jax.experimental import pallas as pl
from jax.experimental.pallas import tpu as pltpu


def _round_up(n, m):
    return ((n + m - 1) // m) * m


def _vmem_capacity_bytes():
    try:
        return int(pltpu.get_tpu_info().vmem_capacity_bytes)
    except Exception:
        return 64 * 1024 * 1024  # conservative: v7x per-TC VMEM


# ----------------------------- kernels --------------------------------------


def _lowrank_kernel(x_ref, w1_ref, b1_ref, w2_ref, o_ref):
    # h = x @ W1 + b1   (A and T folded; f32 accumulation, f32 bias add)
    x = x_ref[...].astype(w1_ref.dtype)              # in-kernel cast (no HBM pass)
    h = jnp.dot(x, w1_ref[...], preferred_element_type=jnp.float32)
    h = h + b1_ref[...]
    # out = h @ W2      (B linear; B.bias == 0 by construction -> dropped)
    o = jnp.dot(h.astype(w2_ref.dtype), w2_ref[...],
                preferred_element_type=jnp.float32)
    o_ref[...] = o.astype(o_ref.dtype)


def _lowrank_kernel_t(x_ref, w1_ref, b1_ref, w2t_ref, ot_ref):
    # Same math, but emits out.T so the batch sits on the lane axis
    # (lane-dense unmasked stores when out_dim < 128).
    x = x_ref[...].astype(w1_ref.dtype)
    h = jnp.dot(x, w1_ref[...], preferred_element_type=jnp.float32)
    h = h + b1_ref[...]
    ht = h.astype(w2t_ref.dtype).T                   # (rank, tm) via XLU (free slot)
    ot = jnp.dot(w2t_ref[...], ht, preferred_element_type=jnp.float32)
    ot_ref[...] = ot.astype(ot_ref.dtype)


# -------------------------- one-time weight prep -----------------------------


def prepare_params(wa, ba, wt, bt, wb, *, compute_dtype=jnp.bfloat16):
    """One-time weight prep (PyTorch layouts in, kernel layouts out).

    wa: (rank, in_dim)  ba: (rank,)   -- A = Linear(in_dim, rank)
    wt: (rank, rank)    bt: (rank,)   -- T = Linear(rank, rank)
    wb: (out_dim, rank)               -- B = Linear(rank, out_dim), bias == 0
    Returns (W1, b1, W2, W2t):
      W1  (in_dim, rank)   = Wa^T @ Wt^T      compute_dtype
      b1  (1, rank)        = ba @ Wt^T + bt   float32
      W2  (rank, out_dim)  = Wb^T             compute_dtype (standard layout)
      W2t (out_dim, rank)  = Wb               compute_dtype (transposed layout)
    """
    waf = wa.astype(jnp.float32)
    wtf = wt.astype(jnp.float32)
    w1 = (waf.T @ wtf.T).astype(compute_dtype)
    b1 = (ba.astype(jnp.float32) @ wtf.T + bt.astype(jnp.float32)).reshape(1, -1)
    w2 = wb.T.astype(compute_dtype)
    w2t = wb.astype(compute_dtype)
    return w1, b1, w2, w2t


# ------------------------------- forward ------------------------------------


def low_rank_block_forward(x, params, *, transposed_output=False,
                           tile_m=1024, out_dtype=None):
    """x: [M, in_dim]; params from prepare_params().

    Returns [M, out_dim]  (standard layout), or
            [out_dim, M]  (transposed_output=True, lane-dense output stores).
    """
    w1, b1, w2, w2t = params
    M, in_dim = x.shape
    rank = w1.shape[1]
    out_dim = w2.shape[1]
    out_dtype = x.dtype if out_dtype is None else out_dtype
    out_itemsize = jnp.dtype(out_dtype).itemsize
    x_itemsize = x.dtype.itemsize
    w_itemsize = jnp.dtype(w1.dtype).itemsize

    # --- tile sizing, VMEM-budget aware (v7x has only 64 MiB per TC) --------
    align = 128 if transposed_output else 16         # lane-dense vs bf16 packing
    tm = min(_round_up(tile_m, align), _round_up(M, align))
    weight_bytes = (w1.size + w2.size) * w_itemsize + b1.size * 4
    capacity = _vmem_capacity_bytes()
    budget = int(0.45 * capacity)                     # for double-buffered x/out tiles
    per_row = 2 * (in_dim * x_itemsize + out_dim * out_itemsize)
    avail = budget - 2 * weight_bytes                 # worst case: weights double-buffered
    if avail >= per_row * align:
        tm = min(tm, max(align, (avail // per_row) // align * align))
    else:
        tm = align
    grid = (pl.cdiv(M, tm),)                          # ragged last block is masked

    footprint = 2 * weight_bytes + tm * per_row + (1 << 20)
    vmem_limit = max(32 << 20, min(int(0.9 * capacity), footprint + (8 << 20)))

    cost = pl.CostEstimate(
        flops=2 * M * rank * (in_dim + out_dim),
        transcendentals=0,
        bytes_accessed=(M * in_dim * x_itemsize
                        + M * out_dim * out_itemsize
                        + weight_bytes))

    x_spec = pl.BlockSpec((tm, in_dim), lambda i: (i, 0))
    if transposed_output:
        kernel = _lowrank_kernel_t
        w_last, w_last_shape = w2t, (out_dim, rank)
        out_shape = jax.ShapeDtypeStruct((out_dim, M), out_dtype)
        out_spec = pl.BlockSpec((out_dim, tm), lambda i: (0, i))
    else:
        kernel = _lowrank_kernel
        w_last, w_last_shape = w2, (rank, out_dim)
        out_shape = jax.ShapeDtypeStruct((M, out_dim), out_dtype)
        out_spec = pl.BlockSpec((tm, out_dim), lambda i: (i, 0))

    def build(weight_mode):
        def wspec(shape):
            if weight_mode is None:
                return pl.BlockSpec(shape, lambda i: (0, 0))
            return pl.BlockSpec(shape, lambda i: (0, 0), pipeline_mode=weight_mode)

        return pl.pallas_call(
            kernel,
            out_shape=out_shape,
            grid_spec=pltpu.PrefetchScalarGridSpec(
                num_scalar_prefetch=0,
                grid=grid,
                in_specs=[x_spec,
                          wspec((in_dim, rank)),   # W1 = Wa^T Wt^T
                          wspec((1, rank)),        # b1 (f32)
                          wspec(w_last_shape)],    # W2 / W2^T
                out_specs=out_spec),
            compiler_params=pltpu.CompilerParams(
                dimension_semantics=("parallel",),
                vmem_limit_bytes=int(vmem_limit)),
            cost_estimate=cost,
        )

    try:
        # Weights never change across the grid: single-buffer them to halve
        # their VMEM footprint (matters most on v7x's 64 MiB per TC).
        return build(pl.Buffered(1))(x, w1, b1, w_last)
    except Exception:
        # Fallback if single-buffering of pipelined operands is unsupported.
        return build(None)(x, w1, b1, w_last)


# ------------------------------- demo / test ---------------------------------


def _init_params(key, in_dim, rank, out_dim):
    """Deterministic synthetic init matching the module's parameter shapes."""
    ks = jax.random.split(key, 5)
    wa = jax.random.uniform(ks[0], (rank, in_dim), jnp.float32, -0.1, 0.1)
    ba = jax.random.uniform(ks[1], (rank,), jnp.float32, -0.1, 0.1)
    wt = jax.random.uniform(ks[2], (rank, rank), jnp.float32, -0.1, 0.1)
    bt = jax.random.uniform(ks[3], (rank,), jnp.float32, -0.1, 0.1)
    low_rank_init = jax.random.normal(ks[4], (out_dim, rank), jnp.float32) * 0.05
    wb = low_rank_init                       # B.weight <- low_rank_init
    bb = jnp.zeros((out_dim,), jnp.float32)  # B.bias zeroed by the module
    return wa, ba, wt, bt, wb, bb


if __name__ == "__main__":
    key = jax.random.PRNGKey(0)
    k_x, k_x2, k_p = jax.random.split(key, 3)

    in_dim, rank, out_dim = 32, 16, 32
    wa, ba, wt, bt, wb, bb = _init_params(k_p, in_dim, rank, out_dim)

    def reference(xx):  # pure-JAX reference, same math as the PyTorch forward
        return ((xx @ wa.T + ba) @ wt.T + bt) @ wb.T + bb

    # f32 compute path: tight check of the folded-weight kernel.
    x = jax.random.normal(k_x, (8, in_dim), jnp.float32)
    ref = reference(x)
    params_f32 = prepare_params(wa, ba, wt, bt, wb, compute_dtype=jnp.float32)
    out_f32 = jax.block_until_ready(low_rank_block_forward(x, params_f32))
    assert out_f32.shape == (8, out_dim)
    assert jnp.allclose(out_f32, ref, atol=1e-4, rtol=1e-4), "f32 mismatch vs reference"

    # bf16 compute path with a ragged batch (exercises the masked last block).
    params = prepare_params(wa, ba, wt, bt, wb)          # bf16 compute (default)
    x2 = jax.random.normal(k_x2, (13, in_dim), jnp.float32)
    ref2 = reference(x2)
    out_bf16 = jax.block_until_ready(low_rank_block_forward(x2, params))
    assert out_bf16.shape == (13, out_dim)
    assert jnp.allclose(out_bf16, ref2, atol=2e-2, rtol=2e-2), "bf16 mismatch vs reference"

    # Lane-dense transposed-output layout (out_dim < 128 -> batch on lanes).
    out_t = jax.block_until_ready(
        low_rank_block_forward(x2, params, transposed_output=True))
    assert out_t.shape == (out_dim, 13)
    assert jnp.allclose(out_t.T, ref2, atol=2e-2, rtol=2e-2), "transposed mismatch"

    print("KERNEL_OK")
</pallas_src>

<mosaic_0001>
module attributes {stable_mosaic.version = 11 : i64} {
  func.func @_lowrank_kernel(%arg0: i32, %arg1: memref<16x32xf32, #tpu.memory_space<vmem>>, %arg2: memref<32x16xf32, #tpu.memory_space<vmem>>, %arg3: memref<1x16xf32, #tpu.memory_space<vmem>>, %arg4: memref<16x32xf32, #tpu.memory_space<vmem>>, %arg5: memref<16x32xf32, #tpu.memory_space<vmem>>) attributes {dimension_semantics = [#tpu.dimension_semantics<parallel>], iteration_bounds = array<i64: 1>, scalar_prefetch = 0 : i64, scratch_operands = 0 : i64, tpu.core_type = #tpu.core_type<tc>, window_params = [{transform_indices = @transform_0, window_bounds = array<i64: 16, 32>}, {pipeline_mode = #tpu.pipeline_mode<synchronous>, transform_indices = @transform_1, window_bounds = array<i64: 32, 16>}, {pipeline_mode = #tpu.pipeline_mode<synchronous>, transform_indices = @transform_2, window_bounds = array<i64: 1, 16>}, {pipeline_mode = #tpu.pipeline_mode<synchronous>, transform_indices = @transform_3, window_bounds = array<i64: 16, 32>}, {transform_indices = @transform_4, window_bounds = array<i64: 16, 32>}]} {
    %c0 = arith.constant 0 : index
    %c0_0 = arith.constant 0 : index
    %0 = vector.load %arg1[%c0, %c0_0] : memref<16x32xf32, #tpu.memory_space<vmem>>, vector<16x32xf32>
    %c0_1 = arith.constant 0 : index
    %c0_2 = arith.constant 0 : index
    %1 = vector.load %arg2[%c0_1, %c0_2] : memref<32x16xf32, #tpu.memory_space<vmem>>, vector<32x16xf32>
    %cst = arith.constant dense<0.000000e+00> : vector<16x16xf32>
    %2 = tpu.matmul %0, %1, %cst {dimension_numbers = #tpu.dot_dimension_numbers<[1], [0], [0], [1], [0, 0, 1, 1], [], []>} : vector<16x32xf32>, vector<32x16xf32>, vector<16x16xf32> -> vector<16x16xf32>
    %c0_3 = arith.constant 0 : index
    %c0_4 = arith.constant 0 : index
    %3 = vector.load %arg3[%c0_3, %c0_4] : memref<1x16xf32, #tpu.memory_space<vmem>>, vector<1x16xf32>
    %4 = vector.broadcast %3 : vector<1x16xf32> to vector<16x16xf32>
    %5 = arith.addf %2, %4 : vector<16x16xf32>
    %c0_5 = arith.constant 0 : index
    %c0_6 = arith.constant 0 : index
    %6 = vector.load %arg4[%c0_5, %c0_6] : memref<16x32xf32, #tpu.memory_space<vmem>>, vector<16x32xf32>
    %cst_7 = arith.constant dense<0.000000e+00> : vector<16x32xf32>
    %7 = tpu.matmul %5, %6, %cst_7 {dimension_numbers = #tpu.dot_dimension_numbers<[1], [0], [0], [1], [0, 0, 1, 1], [], []>} : vector<16x16xf32>, vector<16x32xf32>, vector<16x32xf32> -> vector<16x32xf32>
    %c0_8 = arith.constant 0 : index
    %c0_9 = arith.constant 0 : index
    %8 = vector.load %arg5[%c0_8, %c0_9] : memref<16x32xf32, #tpu.memory_space<vmem>>, vector<16x32xf32>
    tpu.vector_store %arg5[%c0_8, %c0_9], %7 {strides = array<i32>} : memref<16x32xf32, #tpu.memory_space<vmem>>, vector<16x32xf32>,
    return
  }
  func.func @transform_0(%arg0: i32) -> (i32, i32) {
    %c0_i32 = arith.constant 0 : i32
    %c0_i32_0 = arith.constant 0 : i32
    return %arg0, %c0_i32 : i32, i32
  }
  func.func @transform_1(%arg0: i32) -> (i32, i32) {
    %c0_i32 = arith.constant 0 : i32
    %c0_i32_0 = arith.constant 0 : i32
    %c0_i32_1 = arith.constant 0 : i32
    return %c0_i32, %c0_i32_0 : i32, i32
  }
  func.func @transform_2(%arg0: i32) -> (i32, i32) {
    %c0_i32 = arith.constant 0 : i32
    %c0_i32_0 = arith.constant 0 : i32
    %c0_i32_1 = arith.constant 0 : i32
    return %c0_i32, %c0_i32_0 : i32, i32
  }
  func.func @transform_3(%arg0: i32) -> (i32, i32) {
    %c0_i32 = arith.constant 0 : i32
    %c0_i32_0 = arith.constant 0 : i32
    %c0_i32_1 = arith.constant 0 : i32
    return %c0_i32, %c0_i32_0 : i32, i32
  }
  func.func @transform_4(%arg0: i32) -> (i32, i32) {
    %c0_i32 = arith.constant 0 : i32
    %c0_i32_0 = arith.constant 0 : i32
    return %arg0, %c0_i32 : i32, i32
  }
}

module attributes {stable_mosaic.version = 11 : i64} {
  func.func @_lowrank_kernel(%arg0: i32, %arg1: memref<16x32xf32, #tpu.memory_space<vmem>>, %arg2: memref<32x16xf32, #tpu.memory_space<vmem>>, %arg3: memref<1x16xf32, #tpu.memory_space<vmem>>, %arg4: memref<16x32xf32, #tpu.memory_space<vmem>>, %arg5: memref<16x32xf32, #tpu.memory_space<vmem>>) attributes {dimension_semantics = [#tpu.dimension_semantics<parallel>], iteration_bounds = array<i64: 1>, scalar_prefetch = 0 : i64, scratch_operands = 0 : i64, tpu.core_type = #tpu.core_type<tc>, window_params = [{transform_indices = @transform_0, window_bounds = array<i64: 16, 32>}, {pipeline_mode = #tpu.pipeline_mode<synchronous>, transform_indices = @transform_1, window_bounds = array<i64: 32, 16>}, {pipeline_mode = #tpu.pipeline_mode<synchronous>, transform_indices = @transform_2, window_bounds = array<i64: 1, 16>}, {pipeline_mode = #tpu.pipeline_mode<synchronous>, transform_indices = @transform_3, window_bounds = array<i64: 16, 32>}, {transform_indices = @transform_4, window_bounds = array<i64: 16, 32>}]} {
    %c0 = arith.constant 0 : index
    %c0_0 = arith.constant 0 : index
    %0 = vector.load %arg1[%c0, %c0_0] : memref<16x32xf32, #tpu.memory_space<vmem>>, vector<16x32xf32>
    %c0_1 = arith.constant 0 : index
    %c0_2 = arith.constant 0 : index
    %1 = vector.load %arg2[%c0_1, %c0_2] : memref<32x16xf32, #tpu.memory_space<vmem>>, vector<32x16xf32>
    %cst = arith.constant dense<0.000000e+00> : vector<16x16xf32>
    %2 = tpu.matmul %0, %1, %cst {dimension_numbers = #tpu.dot_dimension_numbers<[1], [0], [0], [1], [0, 0, 1, 1], [], []>} : vector<16x32xf32>, vector<32x16xf32>, vector<16x16xf32> -> vector<16x16xf32>
    %c0_3 = arith.constant 0 : index
    %c0_4 = arith.constant 0 : index
    %3 = vector.load %arg3[%c0_3, %c0_4] : memref<1x16xf32, #tpu.memory_space<vmem>>, vector<1x16xf32>
    %4 = vector.broadcast %3 : vector<1x16xf32> to vector<16x16xf32>
    %5 = arith.addf %2, %4 : vector<16x16xf32>
    %c0_5 = arith.constant 0 : index
    %c0_6 = arith.constant 0 : index
    %6 = vector.load %arg4[%c0_5, %c0_6] : memref<16x32xf32, #tpu.memory_space<vmem>>, vector<16x32xf32>
    %cst_7 = arith.constant dense<0.000000e+00> : vector<16x32xf32>
    %7 = tpu.matmul %5, %6, %cst_7 {dimension_numbers = #tpu.dot_dimension_numbers<[1], [0], [0], [1], [0, 0, 1, 1], [], []>} : vector<16x16xf32>, vector<16x32xf32>, vector<16x32xf32> -> vector<16x32xf32>
    %c0_8 = arith.constant 0 : index
    %c0_9 = arith.constant 0 : index
    %8 = vector.load %arg5[%c0_8, %c0_9] : memref<16x32xf32, #tpu.memory_space<vmem>>, vector<16x32xf32>
    tpu.vector_store %arg5[%c0_8, %c0_9], %7 {strides = array<i32>} : memref<16x32xf32, #tpu.memory_space<vmem>>, vector<16x32xf32>,
    return
  }
  func.func @transform_0(%arg0: i32) -> (i32, i32) {
    %c0_i32 = arith.constant 0 : i32
    %c0_i32_0 = arith.constant 0 : i32
    return %arg0, %c0_i32 : i32, i32
  }
  func.func @transform_1(%arg0: i32) -> (i32, i32) {
    %c0_i32 = arith.constant 0 : i32
    %c0_i32_0 = arith.constant 0 : i32
    %c0_i32_1 = arith.constant 0 : i32
    return %c0_i32, %c0_i32_0 : i32, i32
  }
  func.func @transform_2(%arg0: i32) -> (i32, i32) {
    %c0_i32 = arith.constant 0 : i32
    %c0_i32_0 = arith.constant 0 : i32
    %c0_i32_1 = arith.constant 0 : i32
    return %c0_i32, %c0_i32_0 : i32, i32
  }
  func.func @transform_3(%arg0: i32) -> (i32, i32) {
    %c0_i32 = arith.constant 0 : i32
    %c0_i32_0 = arith.constant 0 : i32
    %c0_i32_1 = arith.constant 0 : i32
    return %c0_i32, %c0_i32_0 : i32, i32
  }
  func.func @transform_4(%arg0: i32) -> (i32, i32) {
    %c0_i32 = arith.constant 0 : i32
    %c0_i32_0 = arith.constant 0 : i32
    return %arg0, %c0_i32 : i32, i32
  }
}

</mosaic_0001>

<llo_original>
// kernel: tpu_custom_call.1
$region0: #{tpu_custom_call.1}
  #allocation0 [shape = 'u32[]', space=smem, size = 0x4, offset = 0x4, fixed_abs, tag = 'smem constant byte address 0x4 - core index']
  #allocation1 [shape = 'u32[72,128]{1,0:T(1,128)}', space=vmem, size = 0x9000, scoped, tag = 'internal scratch']
  %s0 = inlined_call_operand.vmem [shape: f32[8,32], index: 0, kind: input, shape index: {}]
  %s1 = inlined_call_operand.vmem [shape: f32[32,16], index: 1, kind: input, shape index: {}]
  %s2 = inlined_call_operand.vmem [shape: f32[1,16], index: 2, kind: input, shape index: {}]
  %s3 = inlined_call_operand.vmem [shape: f32[16,32], index: 3, kind: input, shape index: {}]
  %s4 = inlined_call_operand.hbm [shape: f32[8,32], index: 4, kind: output, shape index: {}]
  %s5 = sld [smem:[#allocation0]]
  $region26: #{tpu_custom_call.1} parent=0
    _
  %s7 = ssub.s32 1, %s5
  %s8 = scalar_select 0, %s7, %s5
  $region1: #{tpu_custom_call.1} parent=0
    #allocation2 [shape = 'u8[8192]{0}', space=vmem, size = 0x2000, scoped, tag = 'output window, operand 0, single buffered']
    #allocation3 [shape = 's32[1]{0}', space=sflag, size = 0x4, scoped, tag = 'scoped memory for tpu_custom_call.1']
    %9 = vsyncpa [#allocation3], 0
    // Predicated region
    $region2: #{tpu_custom_call.1} parent=1 // pred_check
      _
    $region3: #{tpu_custom_call.1} parent=1 // pred_check_branch
      %11 = sbr.rel (0) target = $region5
    $region4: #{tpu_custom_call.1} parent=1 // pred_region
      _
    $region5: #{tpu_custom_call.1} parent=1 // pred_fallthru
      _
    // Predicated region
    $region6: #{tpu_custom_call.1} parent=1 // pred_check
      _
    $region7: #{tpu_custom_call.1} parent=1 // pred_check_branch
      %13 = sbr.rel (0) target = $region9
    $region8: #{tpu_custom_call.1} parent=1 // pred_region
      _
    $region9: #{tpu_custom_call.1} parent=1 // pred_fallthru
      _
    // Predicated region
    $region10: #{tpu_custom_call.1} parent=1 // pred_check
      _
    $region11: #{tpu_custom_call.1} parent=1 // pred_check_branch
      %15 = sbr.rel (0) target = $region13
    $region12: #{tpu_custom_call.1} parent=1 // pred_region
      _
    $region13: #{tpu_custom_call.1} parent=1 // pred_fallthru
      _
    // Predicated region
    $region14: #{tpu_custom_call.1} parent=1 // pred_check
      _
    $region15: #{tpu_custom_call.1} parent=1 // pred_check_branch
      %17 = sbr.rel (0) target = $region17
    $region16: #{tpu_custom_call.1} parent=1 // pred_region
      _
    $region17: #{tpu_custom_call.1} parent=1 // pred_fallthru
      _
    %v18 = vld [vmem:[%s0] sm:$0xff]
    %v19 = vld [vmem:[%s0 + $0x8] sm:$0xff]
    %v20 = vld [vmem:[%s1] sm:$0xff]
    %v21 = vld [vmem:[%s1 + $0x8] sm:$0xff]
    %v22 = vld [vmem:[%s1 + $0x10] sm:$0xff]
    %v23 = vld [vmem:[%s1 + $0x18] sm:$0xff]
    %v24 = vld [vmem:[%s2] sm:$0x1]
    %v26 = vperm.slane %v24, 0
    %vm28 = vcmask 261120
    %v30 = vsel %vm28, %v18, 0
    %v33 = vsel %vm28, %v19, 0
    %35 = vmatpush.msra.mxu0 0.0
    %36 = vmatpush.msra.mxu0 0.0
    %37 = vmatpush.msra.mxu0 0.0
    %38 = vmatpush.msra.mxu0 0.0
    %39 = vmatpush.msra.mxu0 0.0
    %40 = vmatpush.msra.mxu0 0.0
    %41 = vmatpush.msra.mxu0 0.0
    %42 = vmatpush.msra.mxu0 0.0
    %43 = vmatpush.msra.mxu0 0.0
    %44 = vmatpush.msra.mxu0 0.0
    %45 = vmatpush.msra.mxu0 0.0
    %46 = vmatpush.msra.mxu0 0.0
    %47 = vmatpush.msra.mxu0 %v23
    %48 = vmatpush.msra.mxu0 %v22
    %49 = vmatpush.msra.mxu0 %v21
    %50 = vmatpush.msra.mxu0 %v20
    %51 = vmatmul.f32.gmra.mxu0 %v30
    %v52 = vpop.f32.mrf.mxu0
    %v53 = vadd.f32 %v26, %v52
    %54 = vmatmul.f32.gmra.mxu0 %v33
    %v55 = vpop.f32.mrf.mxu0
    %v56 = vadd.f32 %v26, %v55
    %57 = vdwg.mxu0
    %v58 = vld [vmem:[%s3] sm:$0xff]
    %v59 = vld [vmem:[%s3 + $0x8] sm:$0xff]
    %vm60 = vcmask 130048
    %v62 = vsel %vm60, %v53, 0
    %v65 = vsel %vm60, %v56, 0
    %67 = vmatpush.msra.mxu0 0.0
    %68 = vmatpush.msra.mxu0 0.0
    %69 = vmatpush.msra.mxu0 0.0
    %70 = vmatpush.msra.mxu0 0.0
    %71 = vmatpush.msra.mxu0 0.0
    %72 = vmatpush.msra.mxu0 0.0
    %73 = vmatpush.msra.mxu0 0.0
    %74 = vmatpush.msra.mxu0 0.0
    %75 = vmatpush.msra.mxu0 0.0
    %76 = vmatpush.msra.mxu0 0.0
    %77 = vmatpush.msra.mxu0 0.0
    %78 = vmatpush.msra.mxu0 0.0
    %79 = vmatpush.msra.mxu0 0.0
    %80 = vmatpush.msra.mxu0 0.0
    %81 = vmatpush.msra.mxu0 %v59
    %82 = vmatpush.msra.mxu0 %v58
    %83 = vmatmul.f32.gmra.mxu0 %v62
    %v84 = vpop.f32.mrf.mxu0
    %v85 = vadd.f32 0.0, %v84
    %86 = vmatmul.f32.gmra.mxu0 %v65
    %v87 = vpop.f32.mrf.mxu0
    %v88 = vadd.f32 0.0, %v87
    %89 = vdwg.mxu0
    %90 = vst.msk [vmem:[#allocation2] sm:$0xff] %vm28, %v85
    %91 = vst.msk [vmem:[#allocation2 + $0x8] sm:$0xff] %vm28, %v88
    // Predicated region
    $region18: #{tpu_custom_call.1} parent=1 // pred_check
      _
    $region19: #{tpu_custom_call.1} parent=1 // pred_check_branch
      %93 = sbr.rel (0) target = $region21
    $region20: #{tpu_custom_call.1} parent=1 // pred_region
      %95 = vsyncadd [#allocation3], 128
      %s96 = sshll.u32 [#allocation2], 4
      %s97 = int_to_ptr.vmem [resolvable:$true] %s96
      %s98 = sshll.u32 %s4, 4
      %s99 = int_to_ptr.hbm [resolvable:$true] %s98
      %104 = dma.vmem_to_hbm [thread:$0]  %s97, 128, %s99, [#allocation3], 128, 128, 8
    $region21: #{tpu_custom_call.1} parent=1 // pred_fallthru
      _
    // Predicated region
    $region22: #{tpu_custom_call.1} parent=1 // pred_check
      _
    $region23: #{tpu_custom_call.1} parent=1 // pred_check_branch
      %106 = sbr.rel (0) target = $region25
    $region24: #{tpu_custom_call.1} parent=1 // pred_region
      %108 = dma.done [#allocation3], 256
    $region25: #{tpu_custom_call.1} parent=1 // pred_fallthru
      _
    %109 = vsyncpa [#allocation3], 1

// kernel: tpu_custom_call.1
$region0: #{tpu_custom_call.1}
  #allocation0 [shape = 'u32[]', space=smem, size = 0x4, offset = 0x4, fixed_abs, tag = 'smem constant byte address 0x4 - core index']
  #allocation1 [shape = 'u32[72,128]{1,0:T(1,128)}', space=vmem, size = 0x9000, scoped, tag = 'internal scratch']
  %s0 = inlined_call_operand.vmem [shape: f32[8,32], index: 0, kind: input, shape index: {}]
  %s1 = inlined_call_operand.vmem [shape: f32[32,16], index: 1, kind: input, shape index: {}]
  %s2 = inlined_call_operand.vmem [shape: f32[1,16], index: 2, kind: input, shape index: {}]
  %s3 = inlined_call_operand.vmem [shape: f32[16,32], index: 3, kind: input, shape index: {}]
  %s4 = inlined_call_operand.hbm [shape: f32[8,32], index: 4, kind: output, shape index: {}]
  %s5 = sld [smem:[#allocation0]]
  $region26: #{tpu_custom_call.1} parent=0
    _
  %s7 = ssub.s32 1, %s5
  %s8 = scalar_select 0, %s7, %s5
  $region1: #{tpu_custom_call.1} parent=0
    #allocation2 [shape = 'u8[8192]{0}', space=vmem, size = 0x2000, scoped, tag = 'output window, operand 0, single buffered']
    #allocation3 [shape = 's32[1]{0}', space=sflag, size = 0x4, scoped, tag = 'scoped memory for tpu_custom_call.1']
    %9 = vsyncpa [#allocation3], 0
    // Predicated region
    $region2: #{tpu_custom_call.1} parent=1 // pred_check
      _
    $region3: #{tpu_custom_call.1} parent=1 // pred_check_branch
      %11 = sbr.rel (0) target = $region5
    $region4: #{tpu_custom_call.1} parent=1 // pred_region
      _
    $region5: #{tpu_custom_call.1} parent=1 // pred_fallthru
      _
    // Predicated region
    $region6: #{tpu_custom_call.1} parent=1 // pred_check
      _
    $region7: #{tpu_custom_call.1} parent=1 // pred_check_branch
      %13 = sbr.rel (0) target = $region9
    $region8: #{tpu_custom_call.1} parent=1 // pred_region
      _
    $region9: #{tpu_custom_call.1} parent=1 // pred_fallthru
      _
    // Predicated region
    $region10: #{tpu_custom_call.1} parent=1 // pred_check
      _
    $region11: #{tpu_custom_call.1} parent=1 // pred_check_branch
      %15 = sbr.rel (0) target = $region13
    $region12: #{tpu_custom_call.1} parent=1 // pred_region
      _
    $region13: #{tpu_custom_call.1} parent=1 // pred_fallthru
      _
    // Predicated region
    $region14: #{tpu_custom_call.1} parent=1 // pred_check
      _
    $region15: #{tpu_custom_call.1} parent=1 // pred_check_branch
      %17 = sbr.rel (0) target = $region17
    $region16: #{tpu_custom_call.1} parent=1 // pred_region
      _
    $region17: #{tpu_custom_call.1} parent=1 // pred_fallthru
      _
    %v18 = vld [vmem:[%s0] sm:$0xff]
    %v19 = vld [vmem:[%s0 + $0x8] sm:$0xff]
    %v20 = vld [vmem:[%s1] sm:$0xff]
    %v21 = vld [vmem:[%s1 + $0x8] sm:$0xff]
    %v22 = vld [vmem:[%s1 + $0x10] sm:$0xff]
    %v23 = vld [vmem:[%s1 + $0x18] sm:$0xff]
    %v24 = vld [vmem:[%s2] sm:$0x1]
    %v26 = vperm.slane %v24, 0
    %vm28 = vcmask 261120
    %v30 = vsel %vm28, %v18, 0
    %v33 = vsel %vm28, %v19, 0
    %35 = vmatpush.msra.mxu0 0.0
    %36 = vmatpush.msra.mxu0 0.0
    %37 = vmatpush.msra.mxu0 0.0
    %38 = vmatpush.msra.mxu0 0.0
    %39 = vmatpush.msra.mxu0 0.0
    %40 = vmatpush.msra.mxu0 0.0
    %41 = vmatpush.msra.mxu0 0.0
    %42 = vmatpush.msra.mxu0 0.0
    %43 = vmatpush.msra.mxu0 0.0
    %44 = vmatpush.msra.mxu0 0.0
    %45 = vmatpush.msra.mxu0 0.0
    %46 = vmatpush.msra.mxu0 0.0
    %47 = vmatpush.msra.mxu0 %v23
    %48 = vmatpush.msra.mxu0 %v22
    %49 = vmatpush.msra.mxu0 %v21
    %50 = vmatpush.msra.mxu0 %v20
    %51 = vmatmul.f32.gmra.mxu0 %v30
    %v52 = vpop.f32.mrf.mxu0
    %v53 = vadd.f32 %v26, %v52
    %54 = vmatmul.f32.gmra.mxu0 %v33
    %v55 = vpop.f32.mrf.mxu0
    %v56 = vadd.f32 %v26, %v55
    %57 = vdwg.mxu0
    %v58 = vld [vmem:[%s3] sm:$0xff]
    %v59 = vld [vmem:[%s3 + $0x8] sm:$0xff]
    %vm60 = vcmask 130048
    %v62 = vsel %vm60, %v53, 0
    %v65 = vsel %vm60, %v56, 0
    %67 = vmatpush.msra.mxu0 0.0
    %68 = vmatpush.msra.mxu0 0.0
    %69 = vmatpush.msra.mxu0 0.0
    %70 = vmatpush.msra.mxu0 0.0
    %71 = vmatpush.msra.mxu0 0.0
    %72 = vmatpush.msra.mxu0 0.0
    %73 = vmatpush.msra.mxu0 0.0
    %74 = vmatpush.msra.mxu0 0.0
    %75 = vmatpush.msra.mxu0 0.0
    %76 = vmatpush.msra.mxu0 0.0
    %77 = vmatpush.msra.mxu0 0.0
    %78 = vmatpush.msra.mxu0 0.0
    %79 = vmatpush.msra.mxu0 0.0
    %80 = vmatpush.msra.mxu0 0.0
    %81 = vmatpush.msra.mxu0 %v59
    %82 = vmatpush.msra.mxu0 %v58
    %83 = vmatmul.f32.gmra.mxu0 %v62
    %v84 = vpop.f32.mrf.mxu0
    %v85 = vadd.f32 0.0, %v84
    %86 = vmatmul.f32.gmra.mxu0 %v65
    %v87 = vpop.f32.mrf.mxu0
    %v88 = vadd.f32 0.0, %v87
    %89 = vdwg.mxu0
    %90 = vst.msk [vmem:[#allocation2] sm:$0xff] %vm28, %v85
    %91 = vst.msk [vmem:[#allocation2 + $0x8] sm:$0xff] %vm28, %v88
    // Predicated region
    $region18: #{tpu_custom_call.1} parent=1 // pred_check
      _
    $region19: #{tpu_custom_call.1} parent=1 // pred_check_branch
      %93 = sbr.rel (0) target = $region21
    $region20: #{tpu_custom_call.1} parent=1 // pred_region
      %95 = vsyncadd [#allocation3], 128
      %s96 = sshll.u32 [#allocation2], 4
      %s97 = int_to_ptr.vmem [resolvable:$true] %s96
      %s98 = sshll.u32 %s4, 4
      %s99 = int_to_ptr.hbm [resolvable:$true] %s98
      %104 = dma.vmem_to_hbm [thread:$0]  %s97, 128, %s99, [#allocation3], 128, 128, 8
    $region21: #{tpu_custom_call.1} parent=1 // pred_fallthru
      _
    // Predicated region
    $region22: #{tpu_custom_call.1} parent=1 // pred_check
      _
    $region23: #{tpu_custom_call.1} parent=1 // pred_check_branch
      %106 = sbr.rel (0) target = $region25
    $region24: #{tpu_custom_call.1} parent=1 // pred_region
      %108 = dma.done [#allocation3], 256
    $region25: #{tpu_custom_call.1} parent=1 // pred_fallthru
      _
    %109 = vsyncpa [#allocation3], 1

</llo_original>
